<compile_context>
chip_gen: v7x
topology: tpu7x:2x2x1
jax: 0.10.0
libtpu: 0.0.40
codegen_flags: <defaults>
</compile_context>

<pallas_src>
import functools

import jax
import jax.numpy as jnp
from jax.experimental import pallas as pl
from jax.experimental.pallas import tpu as pltpu

_LANE = 128
_SUBLANE = 8


def _pact_kernel_const(x_ref, o_ref, *, alpha, max_v, scale_alpha, inv_scale):
    """y = clamp(x, 0, alpha); y_q = clamp(round(y*scale), -max_v, max_v) * inv_scale."""
    x = x_ref[...].astype(jnp.float32)
    y = jnp.clip(x, 0.0, alpha)
    y_q = jnp.clip(jnp.round(y * scale_alpha), -max_v, max_v) * inv_scale
    o_ref[...] = y_q.astype(o_ref.dtype)


def _pact_kernel_smem(scalar_ref, x_ref, o_ref):
    """Same math, scalars (learnable alpha) read from SMEM."""
    alpha = scalar_ref[0]        # clipping threshold
    max_v = scalar_ref[1]        # 2**(act_bit-1) - 1
    scale_alpha = scalar_ref[2]  # max_v / alpha
    inv_scale = scalar_ref[3]    # 1 / scale_alpha
    x = x_ref[...].astype(jnp.float32)
    y = jnp.clip(x, 0.0, alpha)
    y_q = jnp.clip(jnp.round(y * scale_alpha), -max_v, max_v) * inv_scale
    o_ref[...] = y_q.astype(o_ref.dtype)


def _tile_params_for_device():
    """(target_tile_bytes, vmem_limit_bytes) tuned per TPU generation."""
    kind = ""
    try:
        kind = jax.devices()[0].device_kind.lower()
    except Exception:
        pass
    if "v5 lite" in kind or "v5e" in kind or "v5litepod" in kind:
        # ~820 GB/s: 2 MiB tiles already ~5 us/step; near roofline.
        return 2 << 20, 32 << 20
    if "v6" in kind:
        # ~1.4 TB/s: multi-MiB tiles needed to amortize the ~0.35 us/step cost.
        return 6 << 20, 64 << 20
    if "v7" in kind:
        # ~3.2 TB/s, but only 64 MiB physical VMEM per TC: 8 MiB tiles,
        # 4x tile double buffers = 32 MiB, limit 48 MiB leaves headroom.
        return 8 << 20, 48 << 20
    return 4 << 20, 48 << 20


def pact_relu(x, alpha, act_bit, *, target_tile_bytes=None, vmem_limit_bytes=None,
              donate=False):
    """Apply the PACT quantized ReLU forward to x (any shape, f32 or bf16).

    `alpha` may be a Python float (static / inference: baked into the kernel)
    or a traced JAX scalar (learnable parameter: SMEM scalar path).
    """
    max_v = float(2 ** (act_bit - 1) - 1)
    static_alpha = isinstance(alpha, (int, float)) and not isinstance(alpha, bool)

    if target_tile_bytes is None or vmem_limit_bytes is None:
        auto_tile, auto_vmem = _tile_params_for_device()
        if target_tile_bytes is None:
            target_tile_bytes = auto_tile
        if vmem_limit_bytes is None:
            vmem_limit_bytes = auto_vmem

    orig_shape = x.shape
    total = x.size
    itemsize = jnp.dtype(x.dtype).itemsize
    sublane = 16 if itemsize == 2 else _SUBLANE  # bf16 packs 2 rows per sublane

    # Pad only to a lane multiple (128). The partial last row block is handled
    # by the cdiv grid, so unaligned shapes pay a tiny (<128 elem) pad instead
    # of extra full HBM passes. No pad at all for aligned shapes.
    total_pad = pl.cdiv(total, _LANE) * _LANE
    pad = total_pad - total
    x_flat = x.reshape(-1)
    if pad:
        x_flat = jnp.pad(x_flat, (0, pad))  # PACT(0) = 0; padded outputs discarded

    # Lane-dense slab: widen the lane dim as far as divisibility allows
    # (lane-dense, unmasked wide stores are the big lever for this op).
    lane_w = _LANE
    for k in (32, 16, 8, 4, 2):
        if total_pad % (_LANE * k) == 0:
            lane_w = _LANE * k
            break
    n_rows = total_pad // lane_w
    x2d = x_flat.reshape(n_rows, lane_w)
    slab_bytes = total_pad * itemsize

    # Row tile: ~target_tile_bytes per block (double-buffered in + out = 4x
    # tile of VMEM), rounded to sublane granularity. Medium/large slabs are
    # capped to guarantee >= 2 grid steps so the DMA pipeline overlaps and
    # "parallel" semantics can shard across both v7x TensorCores.
    tr = (target_tile_bytes // (lane_w * itemsize)) // sublane * sublane
    tr = max(sublane, tr)
    if slab_bytes <= (1 << 20) or n_rows <= 2 * sublane:
        tr = min(tr, n_rows)
        if tr >= n_rows:
            tr = n_rows  # single block == full array dims (no (8,128) constraint)
    else:
        half = pl.cdiv(pl.cdiv(n_rows, 2), sublane) * sublane
        tr = max(sublane, min(tr, half))  # at least 2 grid steps

    grid = (pl.cdiv(n_rows, tr),)

    x_spec = pl.BlockSpec((tr, lane_w), lambda i: (i, 0))
    out_spec = pl.BlockSpec((tr, lane_w), lambda i: (i, 0))
    cparams = pltpu.CompilerParams(
        dimension_semantics=("parallel",),          # shards row loop across TCs on v7x
        vmem_limit_bytes=int(vmem_limit_bytes),
    )

    if static_alpha:
        alpha_f = float(alpha)
        scale_alpha = max_v / alpha_f
        inv_scale = 1.0 / scale_alpha
        kernel = functools.partial(_pact_kernel_const, alpha=alpha_f, max_v=max_v,
                                   scale_alpha=scale_alpha, inv_scale=inv_scale)
        in_specs = [x_spec]
        operands = (x2d,)
        aliases = {0: 0} if donate else {}
    else:
        alpha_arr = jnp.asarray(alpha, dtype=jnp.float32).reshape(())
        scale_alpha = jnp.float32(max_v) / alpha_arr
        inv_scale = jnp.float32(1.0) / scale_alpha
        scalars = jnp.stack([alpha_arr, jnp.float32(max_v), scale_alpha, inv_scale])
        kernel = _pact_kernel_smem
        in_specs = [pl.BlockSpec(memory_space=pltpu.MemorySpace.SMEM), x_spec]
        operands = (scalars, x2d)
        aliases = {1: 0} if donate else {}

    out2d = pl.pallas_call(
        kernel,
        out_shape=jax.ShapeDtypeStruct((n_rows, lane_w), x.dtype),
        grid=grid,
        in_specs=in_specs,
        out_specs=out_spec,
        compiler_params=cparams,
        input_output_aliases=aliases,
    )(*operands)

    out_flat = out2d.reshape(-1)
    if pad:
        out_flat = out_flat[:total]
    return out_flat.reshape(orig_shape)


def pact_relu_ref(x, alpha, act_bit):
    """Pure-JAX reference mirroring the PyTorch forward."""
    max_v = float(2 ** (act_bit - 1) - 1)
    y = jnp.clip(x.astype(jnp.float32), 0.0, alpha)
    scale_alpha = max_v / alpha
    return (jnp.clip(jnp.round(y * scale_alpha), -max_v, max_v) / scale_alpha).astype(x.dtype)


# TODO(synk): backward pass of ParametrizedActivationClipping (STE mask + grad_alpha
# reduction) is not implemented; only the forward semantics are provided here.

if __name__ == "__main__":
    key = jax.random.PRNGKey(0)
    # NCHW activation consistent with a conv-net layer.
    x = jax.random.normal(key, (2, 4, 16, 16), dtype=jnp.float32) * 5.0

    act_bit = 8   # activation precision
    alpha = 10.0  # deterministic init of the learnable clipping parameter

    # Static-alpha (inference) path: constants baked into the kernel body.
    out = jax.block_until_ready(pact_relu(x, alpha, act_bit))
    ref = pact_relu_ref(x, alpha, act_bit)
    assert out.shape == x.shape and out.dtype == x.dtype
    assert jnp.allclose(out, ref, atol=1e-5, rtol=1e-5), "static-alpha mismatch"

    # Unaligned shape exercises the lane-only padding + partial-block path.
    x2 = jax.random.normal(jax.random.PRNGKey(1), (2, 3, 7, 5), dtype=jnp.float32) * 5.0
    out2 = jax.block_until_ready(pact_relu(x2, alpha, act_bit))
    assert jnp.allclose(out2, pact_relu_ref(x2, alpha, act_bit), atol=1e-5, rtol=1e-5), \
        "unaligned-shape mismatch"

    # Learnable (traced) alpha goes through the SMEM scalar path.
    alpha_param = jnp.float32(10.0)
    out3 = jax.block_until_ready(pact_relu(x, alpha_param, act_bit))
    assert jnp.allclose(out3, ref, atol=1e-5, rtol=1e-5), "traced-alpha mismatch"

    print("KERNEL_OK")
</pallas_src>

<mosaic_0001>
module attributes {stable_mosaic.version = 11 : i64} {
  func.func @_pact_kernel_const(%arg0: i32, %arg1: memref<1x2048xf32, #tpu.memory_space<vmem>>, %arg2: memref<1x2048xf32, #tpu.memory_space<vmem>>) attributes {dimension_semantics = [#tpu.dimension_semantics<parallel>], iteration_bounds = array<i64: 1>, scalar_prefetch = 0 : i64, scratch_operands = 0 : i64, tpu.core_type = #tpu.core_type<tc>, window_params = [{transform_indices = @transform_0, window_bounds = array<i64: 1, 2048>}, {transform_indices = @transform_1, window_bounds = array<i64: 1, 2048>}]} {
    %c0 = arith.constant 0 : index
    %c0_0 = arith.constant 0 : index
    %0 = vector.load %arg1[%c0, %c0_0] : memref<1x2048xf32, #tpu.memory_space<vmem>>, vector<1x2048xf32>
    %cst = arith.constant 0.000000e+00 : f32
    %cst_1 = arith.constant 1.000000e+01 : f32
    %1 = vector.broadcast %cst : f32 to vector<1x2048xf32>
    %2 = arith.maximumf %1, %0 : vector<1x2048xf32>
    %3 = vector.broadcast %cst_1 : f32 to vector<1x2048xf32>
    %4 = arith.minimumf %3, %2 : vector<1x2048xf32>
    %cst_2 = arith.constant 1.270000e+01 : f32
    %5 = vector.broadcast %cst_2 : f32 to vector<1x2048xf32>
    %6 = arith.mulf %4, %5 : vector<1x2048xf32>
    %7 = math.roundeven %6 : vector<1x2048xf32>
    %cst_3 = arith.constant -1.270000e+02 : f32
    %cst_4 = arith.constant 1.270000e+02 : f32
    %8 = vector.broadcast %cst_3 : f32 to vector<1x2048xf32>
    %9 = arith.maximumf %8, %7 : vector<1x2048xf32>
    %10 = vector.broadcast %cst_4 : f32 to vector<1x2048xf32>
    %11 = arith.minimumf %10, %9 : vector<1x2048xf32>
    %cst_5 = arith.constant 0.0787401571 : f32
    %12 = vector.broadcast %cst_5 : f32 to vector<1x2048xf32>
    %13 = arith.mulf %11, %12 : vector<1x2048xf32>
    %c0_6 = arith.constant 0 : index
    %c0_7 = arith.constant 0 : index
    %14 = vector.load %arg2[%c0_6, %c0_7] : memref<1x2048xf32, #tpu.memory_space<vmem>>, vector<1x2048xf32>
    tpu.vector_store %arg2[%c0_6, %c0_7], %13 {strides = array<i32>} : memref<1x2048xf32, #tpu.memory_space<vmem>>, vector<1x2048xf32>,
    return
  }
  func.func @transform_0(%arg0: i32) -> (i32, i32) {
    %c0_i32 = arith.constant 0 : i32
    %c0_i32_0 = arith.constant 0 : i32
    return %arg0, %c0_i32 : i32, i32
  }
  func.func @transform_1(%arg0: i32) -> (i32, i32) {
    %c0_i32 = arith.constant 0 : i32
    %c0_i32_0 = arith.constant 0 : i32
    return %arg0, %c0_i32 : i32, i32
  }
}

</mosaic_0001>

<llo_original>
// kernel: tpu_custom_call.1
$region0: #{tpu_custom_call.1}
  #allocation0 [shape = 'u32[]', space=smem, size = 0x4, offset = 0x4, fixed_abs, tag = 'smem constant byte address 0x4 - core index']
  #allocation1 [shape = 'u32[144,128]{1,0:T(1,128)}', space=vmem, size = 0x12000, scoped, tag = 'internal scratch']
  %s0 = inlined_call_operand.hbm [shape: f32[1,2048], index: 0, kind: input, shape index: {}]
  %s1 = inlined_call_operand.hbm [shape: f32[1,2048], index: 1, kind: output, shape index: {}]
  %s2 = sld [smem:[#allocation0]]
  $region18: #{tpu_custom_call.1} parent=0
    _
  %s4 = ssub.s32 1, %s2
  %s5 = scalar_select 0, %s4, %s2
  $region1: #{tpu_custom_call.1} parent=0
    #allocation2 [shape = 'u8[8192]{0}', space=vmem, size = 0x2000, scoped, tag = 'input window, operand 0, single buffered']
    #allocation3 [shape = 's32[1]{0}', space=sflag, size = 0x4, scoped, tag = 'scoped memory for tpu_custom_call.1']
    #allocation4 [shape = 's32[1]{0}', space=sflag, size = 0x4, scoped, tag = 'scoped memory for tpu_custom_call.1']
    #allocation5 [shape = 'u8[8192]{0}', space=vmem, size = 0x2000, scoped, tag = 'output window, operand 0, single buffered']
    %6 = vsyncpa [#allocation3], 0
    %7 = vsyncpa [#allocation4], 0
    // Predicated region
    $region2: #{tpu_custom_call.1} parent=1 // pred_check
      _
    $region3: #{tpu_custom_call.1} parent=1 // pred_check_branch
      %9 = sbr.rel (0) target = $region5
    $region4: #{tpu_custom_call.1} parent=1 // pred_region
      %s11 = ssub.s32 256, 256
      %12 = vsyncadd [#allocation3], %s11
      %s14 = sshll.u32 [#allocation2], 4
      %s15 = int_to_ptr.vmem [resolvable:$true] %s14
      %17 = dma.hbm_to_vmem [thread:$0]  %s0, 256, %s15, [#allocation3]
    $region5: #{tpu_custom_call.1} parent=1 // pred_fallthru
      _
    // Predicated region
    $region6: #{tpu_custom_call.1} parent=1 // pred_check
      _
    $region7: #{tpu_custom_call.1} parent=1 // pred_check_branch
      %19 = sbr.rel (0) target = $region9
    $region8: #{tpu_custom_call.1} parent=1 // pred_region
      %20 = dma.done [#allocation3], 256
    $region9: #{tpu_custom_call.1} parent=1 // pred_fallthru
      _
    %v21 = vld [vmem:[#allocation2] sm:$0xff]
    %v22 = vld [vmem:[#allocation2 + $0x8] sm:$0xff]
    %v23 = vmax.f32 %v21, 0.0
    %v24 = vmax.f32 %v22, 0.0
    %v25 = vmin.f32 %v23, 10.0
    %v26 = vmin.f32 %v24, 10.0
    %v27 = vmul.f32 %v25, 12.7
    %v28 = vmul.f32 %v26, 12.7
    %v29 = vround.ne.pseudo %v27
    %v30 = vround.ne.pseudo %v28
    %v31 = vmax.f32 %v29, -127.0
    %v32 = vmax.f32 %v30, -127.0
    %v33 = vmin.f32 %v31, 127.0
    %v34 = vmin.f32 %v32, 127.0
    %v35 = vmul.f32 %v33, 0.07874016
    %v36 = vmul.f32 %v34, 0.07874016
    %37 = vst [vmem:[#allocation5] sm:$0xff] %v35
    %38 = vst [vmem:[#allocation5 + $0x8] sm:$0xff] %v36
    // Predicated region
    $region10: #{tpu_custom_call.1} parent=1 // pred_check
      _
    $region11: #{tpu_custom_call.1} parent=1 // pred_check_branch
      %40 = sbr.rel (0) target = $region13
    $region12: #{tpu_custom_call.1} parent=1 // pred_region
      %s42 = ssub.s32 256, 256
      %43 = vsyncadd [#allocation4], %s42
      %s45 = sshll.u32 [#allocation5], 4
      %s46 = int_to_ptr.vmem [resolvable:$true] %s45
      %48 = dma.vmem_to_hbm [thread:$0]  %s46, 256, %s1, [#allocation4]
    $region13: #{tpu_custom_call.1} parent=1 // pred_fallthru
      _
    // Predicated region
    $region14: #{tpu_custom_call.1} parent=1 // pred_check
      _
    $region15: #{tpu_custom_call.1} parent=1 // pred_check_branch
      %50 = sbr.rel (0) target = $region17
    $region16: #{tpu_custom_call.1} parent=1 // pred_region
      %51 = dma.done [#allocation4], 256
    $region17: #{tpu_custom_call.1} parent=1 // pred_fallthru
      _
    %52 = vsyncpa [#allocation3], 1
    %53 = vsyncpa [#allocation4], 1

</llo_original>
